<compile_context>
chip_gen: v5e
topology: v5e:2x2
jax: 0.10.0
libtpu: 0.0.40
codegen_flags: <defaults>
</compile_context>

<pallas_src>
import functools

import jax
import jax.numpy as jnp
from jax import lax
from jax.experimental import pallas as pl
from jax.experimental.pallas import tpu as pltpu

LANE = 128
SUBLANE = 8
MAX_BLOCK_ROWS = 4096      # (4096, 128) f32 tile = 2 MiB per input buffer.
NUM_CORE_SPLITS = 2        # leading "parallel" axis (v7x: 2 TCs; free elsewhere)


def _round_up(x, m):
    return (x + m - 1) // m * m


def _qr_partial_kernel(pred_ref, targ_ref, out_ref, *, q, n_rows, block_rows,
                       blocks_per_core, mask_threshold, needs_mask):
    """Accumulates per-core (8,128) partial sums of the quantile loss."""
    c = pl.program_id(0)           # core-split index ("parallel")
    i = pl.program_id(1)           # row-block index within the split ("arbitrary")
    gb = c * blocks_per_core + i   # global (unclamped) row-block index

    @pl.when(i == 0)
    def _():
        out_ref[...] = jnp.zeros_like(out_ref)

    e = targ_ref[...].astype(jnp.float32) - pred_ref[...].astype(jnp.float32)
    # max(q*e, (q-1)*e) == q*e - min(e, 0): one mul + one min on the VPU.
    loss = jnp.float32(q) * e - jnp.minimum(e, jnp.float32(0.0))

    def accumulate(x):
        # Fold sublane groups onto the resident (8,128) accumulator block:
        # leading-axis sum = pure VALU adds, no XLU, no large scratch RMW.
        out_ref[...] += x.reshape(block_rows // SUBLANE, SUBLANE, LANE).sum(axis=0)

    if needs_mask:
        # Only the ragged last real block and/or the duplicated clamp block
        # pay the iota+compare+select; every other step takes the cheap branch.
        @pl.when(gb >= mask_threshold)
        def _():
            row_ids = gb * block_rows + lax.broadcasted_iota(jnp.int32, loss.shape, 0)
            accumulate(jnp.where(row_ids < n_rows, loss, 0.0))

        @pl.when(gb < mask_threshold)
        def _():
            accumulate(loss)
    else:
        accumulate(loss)


@functools.partial(jax.jit, static_argnames=("q",))
def quantile_regression_loss(predict, target, q):
    flat_p = predict.reshape(-1)
    flat_t = target.reshape(-1)
    n = flat_p.size

    n_rows = n // LANE
    n_main = n_rows * LANE
    tail = n - n_main
    inv_n = 1.0 / float(n)  # exact host-side double; rounded to f32 once at use

    total = jnp.float32(0.0)

    if n_rows > 0:
        block_rows = min(MAX_BLOCK_ROWS, _round_up(n_rows, SUBLANE))
        total_blocks = pl.cdiv(n_rows, block_rows)
        blocks_per_core = pl.cdiv(total_blocks, NUM_CORE_SPLITS)
        ragged = (n_rows % block_rows) != 0
        # First global block index that needs masking (ragged last real block,
        # plus any duplicated clamp block when total_blocks is odd).
        mask_threshold = total_blocks - 1 if ragged else total_blocks
        needs_mask = mask_threshold < NUM_CORE_SPLITS * blocks_per_core

        # NOTE: when a <128-element lane tail exists, this slice materializes a
        # copy of the main region (extra HBM traffic).  Accepted: NN shapes are
        # virtually always a multiple of 128 elements.
        # TODO(synk): zero-copy 1D-blocked path for n % 128 != 0 inputs.
        main_p = (flat_p if tail == 0 else flat_p[:n_main]).reshape(n_rows, LANE)
        main_t = (flat_t if tail == 0 else flat_t[:n_main]).reshape(n_rows, LANE)

        kernel = functools.partial(
            _qr_partial_kernel, q=float(q), n_rows=n_rows, block_rows=block_rows,
            blocks_per_core=blocks_per_core, mask_threshold=mask_threshold,
            needs_mask=needs_mask)

        def in_map(c, i):
            # Clamp so an odd block count never indexes past the array; the
            # duplicated block is fully masked out in-kernel.
            return (jnp.minimum(c * blocks_per_core + i, total_blocks - 1), 0)

        partials = pl.pallas_call(
            kernel,
            out_shape=jax.ShapeDtypeStruct((NUM_CORE_SPLITS * SUBLANE, LANE),
                                           jnp.float32),
            grid=(NUM_CORE_SPLITS, blocks_per_core),
            in_specs=[
                pl.BlockSpec((block_rows, LANE), in_map),
                pl.BlockSpec((block_rows, LANE), in_map),
            ],
            out_specs=pl.BlockSpec((SUBLANE, LANE), lambda c, i: (c, 0)),
            compiler_params=pltpu.CompilerParams(
                dimension_semantics=("parallel", "arbitrary")),
        )(main_p, main_t)
        total = total + jnp.sum(partials)

    if tail > 0:
        # <128-element ragged lane tail: negligible, handled in plain JAX.
        e = flat_t[n_main:].astype(jnp.float32) - flat_p[n_main:].astype(jnp.float32)
        total = total + jnp.sum(jnp.float32(q) * e - jnp.minimum(e, jnp.float32(0.0)))

    return total * inv_n


if __name__ == "__main__":
    key = jax.random.PRNGKey(0)
    k1, k2 = jax.random.split(key)

    # Small NCHW-like regression output shapes.
    predict = jax.random.normal(k1, (2, 4, 16, 16), dtype=jnp.float32)
    target = jax.random.normal(k2, (2, 4, 16, 16), dtype=jnp.float32)
    q = 0.7

    result = quantile_regression_loss(predict, target, q)
    result = jax.block_until_ready(result)

    # pure-JAX reference check
    e = target - predict
    ref = jnp.mean(jnp.maximum(q * e, (q - 1.0) * e))
    assert jnp.allclose(result, ref, rtol=1e-5, atol=1e-6), (result, ref)

    print("KERNEL_OK")
</pallas_src>

<mosaic_0001>
module attributes {stable_mosaic.version = 11 : i64} {
  func.func @_qr_partial_kernel(%arg0: i32, %arg1: i32, %arg2: memref<16x128xf32, #tpu.memory_space<vmem>>, %arg3: memref<16x128xf32, #tpu.memory_space<vmem>>, %arg4: memref<8x128xf32, #tpu.memory_space<vmem>>) attributes {dimension_semantics = [#tpu.dimension_semantics<parallel>, #tpu.dimension_semantics<arbitrary>], iteration_bounds = array<i64: 2, 1>, scalar_prefetch = 0 : i64, scratch_operands = 0 : i64, tpu.core_type = #tpu.core_type<tc>, window_params = [{transform_indices = @transform_0, window_bounds = array<i64: 16, 128>}, {transform_indices = @transform_1, window_bounds = array<i64: 16, 128>}, {transform_indices = @transform_2, window_bounds = array<i64: 8, 128>}]} {
    %c1_i32 = arith.constant 1 : i32
    %0 = arith.muli %arg0, %c1_i32 : i32
    %1 = arith.addi %0, %arg1 : i32
    %c0_i32 = arith.constant 0 : i32
    %2 = arith.cmpi eq, %arg1, %c0_i32 : i32
    %3 = arith.extui %2 : i1 to i32
    %c0_i32_0 = arith.constant 0 : i32
    %4 = arith.cmpi ne, %3, %c0_i32_0 : i32
    scf.if %4 {
      %cst_9 = arith.constant 0.000000e+00 : f32
      %19 = vector.broadcast %cst_9 : f32 to vector<8x128xf32>
      %c0_10 = arith.constant 0 : index
      %c0_11 = arith.constant 0 : index
      %20 = vector.load %arg4[%c0_10, %c0_11] : memref<8x128xf32, #tpu.memory_space<vmem>>, vector<8x128xf32>
      tpu.vector_store %arg4[%c0_10, %c0_11], %19 {strides = array<i32>} : memref<8x128xf32, #tpu.memory_space<vmem>>, vector<8x128xf32>,
    } else {
    }
    %c0 = arith.constant 0 : index
    %c0_1 = arith.constant 0 : index
    %5 = vector.load %arg3[%c0, %c0_1] : memref<16x128xf32, #tpu.memory_space<vmem>>, vector<16x128xf32>
    %c0_2 = arith.constant 0 : index
    %c0_3 = arith.constant 0 : index
    %6 = vector.load %arg2[%c0_2, %c0_3] : memref<16x128xf32, #tpu.memory_space<vmem>>, vector<16x128xf32>
    %7 = arith.subf %5, %6 : vector<16x128xf32>
    %cst = arith.constant 0.699999988 : f32
    %8 = vector.broadcast %cst : f32 to vector<16x128xf32>
    %9 = arith.mulf %8, %7 : vector<16x128xf32>
    %cst_4 = arith.constant 0.000000e+00 : f32
    %10 = vector.broadcast %cst_4 : f32 to vector<16x128xf32>
    %11 = arith.minimumf %7, %10 : vector<16x128xf32>
    %12 = arith.subf %9, %11 : vector<16x128xf32>
    %c1_i32_5 = arith.constant 1 : i32
    %13 = arith.cmpi sge, %1, %c1_i32_5 : i32
    %14 = arith.extui %13 : i1 to i32
    %c0_i32_6 = arith.constant 0 : i32
    %15 = arith.cmpi ne, %14, %c0_i32_6 : i32
    scf.if %15 {
      %c16_i32 = arith.constant 16 : i32
      %19 = arith.muli %1, %c16_i32 : i32
      %20 = tpu.iota {dimensions = array<i32: 0>} : vector<16x128xi32>
      %21 = vector.broadcast %19 : i32 to vector<16x128xi32>
      %22 = arith.addi %21, %20 : vector<16x128xi32>
      %c16_i32_9 = arith.constant 16 : i32
      %23 = vector.broadcast %c16_i32_9 : i32 to vector<16x128xi32>
      %24 = arith.cmpi slt, %22, %23 : vector<16x128xi32>
      %cst_10 = arith.constant 0.000000e+00 : f32
      %25 = vector.broadcast %cst_10 : f32 to vector<16x128xf32>
      %26 = arith.select %24, %12, %25 : vector<16x128xi1>, vector<16x128xf32>
      %c0_11 = arith.constant 0 : index
      %c0_12 = arith.constant 0 : index
      %27 = vector.load %arg4[%c0_11, %c0_12] : memref<8x128xf32, #tpu.memory_space<vmem>>, vector<8x128xf32>
      %28 = vector.shape_cast %26 : vector<16x128xf32> to vector<2x8x128xf32>
      %cst_13 = arith.constant dense<0.000000e+00> : vector<8x128xf32>
      %29 = vector.multi_reduction <add>, %28, %cst_13 [0] : vector<2x8x128xf32> to vector<8x128xf32>
      %30 = arith.addf %27, %29 : vector<8x128xf32>
      %c0_14 = arith.constant 0 : index
      %c0_15 = arith.constant 0 : index
      %31 = vector.load %arg4[%c0_14, %c0_15] : memref<8x128xf32, #tpu.memory_space<vmem>>, vector<8x128xf32>
      tpu.vector_store %arg4[%c0_14, %c0_15], %30 {strides = array<i32>} : memref<8x128xf32, #tpu.memory_space<vmem>>, vector<8x128xf32>,
    } else {
    }
    %c1_i32_7 = arith.constant 1 : i32
    %16 = arith.cmpi slt, %1, %c1_i32_7 : i32
    %17 = arith.extui %16 : i1 to i32
    %c0_i32_8 = arith.constant 0 : i32
    %18 = arith.cmpi ne, %17, %c0_i32_8 : i32
    scf.if %18 {
      %c0_9 = arith.constant 0 : index
      %c0_10 = arith.constant 0 : index
      %19 = vector.load %arg4[%c0_9, %c0_10] : memref<8x128xf32, #tpu.memory_space<vmem>>, vector<8x128xf32>
      %20 = vector.shape_cast %12 : vector<16x128xf32> to vector<2x8x128xf32>
      %cst_11 = arith.constant dense<0.000000e+00> : vector<8x128xf32>
      %21 = vector.multi_reduction <add>, %20, %cst_11 [0] : vector<2x8x128xf32> to vector<8x128xf32>
      %22 = arith.addf %19, %21 : vector<8x128xf32>
      %c0_12 = arith.constant 0 : index
      %c0_13 = arith.constant 0 : index
      %23 = vector.load %arg4[%c0_12, %c0_13] : memref<8x128xf32, #tpu.memory_space<vmem>>, vector<8x128xf32>
      tpu.vector_store %arg4[%c0_12, %c0_13], %22 {strides = array<i32>} : memref<8x128xf32, #tpu.memory_space<vmem>>, vector<8x128xf32>,
    } else {
    }
    return
  }
  func.func @transform_0(%arg0: i32, %arg1: i32) -> (i32, i32) {
    %c1_i32 = arith.constant 1 : i32
    %0 = arith.muli %arg0, %c1_i32 : i32
    %1 = arith.addi %0, %arg1 : i32
    %c0_i32 = arith.constant 0 : i32
    %2 = arith.minsi %1, %c0_i32 : i32
    %c0_i32_0 = arith.constant 0 : i32
    %c0_i32_1 = arith.constant 0 : i32
    return %2, %c0_i32_0 : i32, i32
  }
  func.func @transform_1(%arg0: i32, %arg1: i32) -> (i32, i32) {
    %c1_i32 = arith.constant 1 : i32
    %0 = arith.muli %arg0, %c1_i32 : i32
    %1 = arith.addi %0, %arg1 : i32
    %c0_i32 = arith.constant 0 : i32
    %2 = arith.minsi %1, %c0_i32 : i32
    %c0_i32_0 = arith.constant 0 : i32
    %c0_i32_1 = arith.constant 0 : i32
    return %2, %c0_i32_0 : i32, i32
  }
  func.func @transform_2(%arg0: i32, %arg1: i32) -> (i32, i32) {
    %c0_i32 = arith.constant 0 : i32
    %c0_i32_0 = arith.constant 0 : i32
    return %arg0, %c0_i32 : i32, i32
  }
}

</mosaic_0001>

<llo_original>
// kernel: quantile_regression_loss.1
$region0: #{quantile_regression_loss.1}
  #allocation0 [shape = 'u32[]', space=smem, size = 0x4, offset = 0x4, fixed_abs, tag = 'smem constant byte address 0x4 - core index']
  #allocation1 [shape = 'u32[72,128]{1,0:T(1,128)}', space=vmem, size = 0x9000, scoped, tag = 'internal scratch']
  %s0 = inlined_call_operand.vmem [shape: f32[16,128], index: 0, kind: input, shape index: {}]
  %s1 = inlined_call_operand.vmem [shape: f32[16,128], index: 1, kind: input, shape index: {}]
  %s2 = inlined_call_operand.vmem [shape: f32[16,128], index: 2, kind: output, shape index: {}]
  %s3 = sld [smem:[#allocation0]]
  $region53: #{quantile_regression_loss.1} parent=0
    _
  %s5 = ssub.s32 1, %s3
  %s6 = scalar_select 0, %s5, %s3
  loop: start=0, step=1, limit=4
  $region2: #{quantile_regression_loss.1} parent=0 // loop_pre_header
    _
  $region3: #{quantile_regression_loss.1} parent=0 // loop_header
    %s8 = sphi 0, %s12
    %p9 = scmp.ge.s32.totalorder %s8, 4
    %s15 = sphi 0, %s27
    %s16 = sphi 0, %s23
    %s17 = sphi 0, %s15
    %s18 = sphi 0, %s16
    %s19 = sphi 0, %s17
    %s20 = sphi 0, %s18
    %s36 = sphi 0, %s38
    %s39 = sphi 0, %s36
    %s40 = sphi 0, %s39
    %s56 = sphi 0, %s40
    %s68 = sphi 0, %s70
    %s71 = sphi 0, %s68
    %s72 = sphi 0, %s71
    %s88 = sphi 0, %s72
    %s94 = sphi 0, %s96
    %s97 = sphi 0, %s94
    %s98 = sphi 0, %s97
    %s114 = sphi 0, %s98
  $region4: #{quantile_regression_loss.1} parent=0 // loop_header_branch
    %11 = sbr.rel (%p9) target = $region8
  $region5: #{quantile_regression_loss.1} parent=0 // loop_body
    %s13 = ssub.s32 %s8, 1
    %s14 = ssub.s32 %s8, 2
    %s21 = sadd.s32 1, %s16
    %p22 = scmp.ge.s32.totalorder %s21, 1
    %s23 = scalar_select %p22, 0, %s21
    %s24 = sadd.s32 1, %s15
    %s25 = scalar_select %p22, %s24, %s15
    %p26 = scmp.ge.s32.totalorder %s25, 2
    %s27 = scalar_select %p26, 0, %s25
    %s28 = sadd.s32 %s15, %s16
    %p29 = scmp.lt.s32.totalorder %s28, 0
    %s30 = scalar_select %p29, %s28, 0
    %s31 = sadd.s32 %s27, %s23
    %p32 = scmp.lt.s32.totalorder %s31, 0
    %s33 = scalar_select %p32, %s31, 0
    %s34 = ssub.s32 %s30, %s33
    %p35 = scmp.eq.s32.totalorder %s34, 0
    %s37 = sadd.s32 %s36, 1
    %s38 = scalar_select %p35, %s36, %s37
    %p41 = pneg %p35
    %p42 = scmp.eq.s32.totalorder %s8, 1
    %p43 = por %p41, %p42
    %p44 = scmp.ne.s32.totalorder %s36, %s39
    %p45 = scmp.eq.s32.totalorder %s8, 0
    %p46 = por %p44, %p45
    %p47 = scmp.ne.s32.totalorder %s36, %s39
    %p48 = scmp.eq.s32.totalorder %s13, 1
    %p49 = por %p47, %p48
    %p50 = scmp.ne.s32.totalorder %s39, %s40
    %p51 = scmp.eq.s32.totalorder %s13, 0
    %p52 = por %p50, %p51
    %p53 = scmp.ne.s32.totalorder %s39, %s40
    %p54 = scmp.eq.s32.totalorder %s14, 1
    %p55 = por %p53, %p54
    %p57 = scmp.ne.s32.totalorder %s40, %s56
    %p58 = scmp.eq.s32.totalorder %s14, 0
    %p59 = por %p57, %p58
    %s60 = sadd.s32 %s15, %s16
    %p61 = scmp.lt.s32.totalorder %s60, 0
    %s62 = scalar_select %p61, %s60, 0
    %s63 = sadd.s32 %s27, %s23
    %p64 = scmp.lt.s32.totalorder %s63, 0
    %s65 = scalar_select %p64, %s63, 0
    %s66 = ssub.s32 %s62, %s65
    %p67 = scmp.eq.s32.totalorder %s66, 0
    %s69 = sadd.s32 %s68, 1
    %s70 = scalar_select %p67, %s68, %s69
    %p73 = pneg %p67
    %p74 = scmp.eq.s32.totalorder %s8, 1
    %p75 = por %p73, %p74
    %p76 = scmp.ne.s32.totalorder %s68, %s71
    %p77 = scmp.eq.s32.totalorder %s8, 0
    %p78 = por %p76, %p77
    %p79 = scmp.ne.s32.totalorder %s68, %s71
    %p80 = scmp.eq.s32.totalorder %s13, 1
    %p81 = por %p79, %p80
    %p82 = scmp.ne.s32.totalorder %s71, %s72
    %p83 = scmp.eq.s32.totalorder %s13, 0
    %p84 = por %p82, %p83
    %p85 = scmp.ne.s32.totalorder %s71, %s72
    %p86 = scmp.eq.s32.totalorder %s14, 1
    %p87 = por %p85, %p86
    %p89 = scmp.ne.s32.totalorder %s72, %s88
    %p90 = scmp.eq.s32.totalorder %s14, 0
    %p91 = por %p89, %p90
    %s92 = ssub.s32 %s15, %s27
    %p93 = scmp.eq.s32.totalorder %s92, 0
    %s95 = sadd.s32 %s94, 1
    %s96 = scalar_select %p93, %s94, %s95
    %p99 = pneg %p93
    %p100 = scmp.eq.s32.totalorder %s8, 1
    %p101 = por %p99, %p100
    %p102 = scmp.ne.s32.totalorder %s94, %s97
    %p103 = scmp.eq.s32.totalorder %s8, 0
    %p104 = por %p102, %p103
    %p105 = scmp.ne.s32.totalorder %s94, %s97
    %p106 = scmp.eq.s32.totalorder %s13, 1
    %p107 = por %p105, %p106
    %p108 = scmp.ne.s32.totalorder %s97, %s98
    %p109 = scmp.eq.s32.totalorder %s13, 0
    %p110 = por %p108, %p109
    %p111 = scmp.ne.s32.totalorder %s97, %s98
    %p112 = scmp.eq.s32.totalorder %s14, 1
    %p113 = por %p111, %p112
    %p115 = scmp.ne.s32.totalorder %s98, %s114
    %p116 = scmp.eq.s32.totalorder %s14, 0
    %p117 = por %p115, %p116
    %p118 = scmp.le.s32.totalorder 1, %s8
    %p119 = scmp.lt.s32.totalorder %s8, 3
    %p120 = pnand %p118, %p119
    %p121 = pneg %p120
    // Predicated region
    $region9: #{quantile_regression_loss.1} parent=5 // pred_check
      _
    $region10: #{quantile_regression_loss.1} parent=5 // pred_check_branch
      %123 = sbr.rel (%p120) target = $region12
    $region11: #{quantile_regression_loss.1} parent=5 // pred_region
      %s124 = ssub.s32 %s8, 1
    $region12: #{quantile_regression_loss.1} parent=5 // pred_fallthru
      _
    %p125 = scmp.lt.s32.totalorder %s8, 2
    // Predicated region
    $region13: #{quantile_regression_loss.1} parent=5 // pred_check
      %p126 = pneg %p125
    $region14: #{quantile_regression_loss.1} parent=5 // pred_check_branch
      %128 = sbr.rel (%p126) target = $region16
    $region15: #{quantile_regression_loss.1} parent=5 // pred_region
      // Predicated region
      $region17: #{quantile_regression_loss.1} parent=15 // pred_check
        %p129 = pneg %p46
      $region18: #{quantile_regression_loss.1} parent=15 // pred_check_branch
        %131 = sbr.rel (%p129) target = $region20
      $region19: #{quantile_regression_loss.1} parent=15 // pred_region
        %s132 = sadd.s32 %s15, %s16
        %p133 = scmp.lt.s32.totalorder %s132, 0
        %s134 = scalar_select %p133, %s132, 0
        %s135 = smul.u32 2, %s134
        %p136 = scmp.lt.s32.totalorder %s135, 1
        %s137 = scalar_select %p136, %s135, 1
        %s138 = smul.addr %s137, 8
        %s139 = scalar_lea.vmem %s0, %s138
        %s140 = sadd.s32 %s15, %s16
        %p141 = scmp.lt.s32.totalorder %s140, 0
        %s142 = scalar_select %p141, %s140, 0
        %s143 = smul.u32 2, %s142
      $region20: #{quantile_regression_loss.1} parent=15 // pred_fallthru
        _
      // Predicated region
      $region21: #{quantile_regression_loss.1} parent=15 // pred_check
        %p144 = pneg %p78
      $region22: #{quantile_regression_loss.1} parent=15 // pred_check_branch
        %146 = sbr.rel (%p144) target = $region24
      $region23: #{quantile_regression_loss.1} parent=15 // pred_region
        %s147 = sadd.s32 %s15, %s16
        %p148 = scmp.lt.s32.totalorder %s147, 0
        %s149 = scalar_select %p148, %s147, 0
        %s150 = smul.u32 2, %s149
        %p151 = scmp.lt.s32.totalorder %s150, 1
        %s152 = scalar_select %p151, %s150, 1
        %s153 = smul.addr %s152, 8
        %s154 = scalar_lea.vmem %s1, %s153
        %s155 = sadd.s32 %s15, %s16
        %p156 = scmp.lt.s32.totalorder %s155, 0
        %s157 = scalar_select %p156, %s155, 0
        %s158 = smul.u32 2, %s157
      $region24: #{quantile_regression_loss.1} parent=15 // pred_fallthru
        _
    $region16: #{quantile_regression_loss.1} parent=5 // pred_fallthru
      _
    %p159 = scmp.le.s32.totalorder 1, %s8
    %p160 = scmp.lt.s32.totalorder %s8, 3
    %p161 = pnand %p159, %p160
    %p162 = pneg %p161
    // Predicated region
    $region25: #{quantile_regression_loss.1} parent=5 // pred_check
      _
    $region26: #{quantile_regression_loss.1} parent=5 // pred_check_branch
      %164 = sbr.rel (%p161) target = $region28
    $region27: #{quantile_regression_loss.1} parent=5 // pred_region
      %s165 = ssub.s32 %s8, 1
      %s166 = sadd.s32 %s17, %s18
      %p167 = scmp.lt.s32.totalorder %s166, 0
      %s168 = scalar_select %p167, %s166, 0
      %s169 = smul.u32 2, %s168
      %p170 = scmp.lt.s32.totalorder %s169, 1
      %s171 = scalar_select %p170, %s169, 1
      %s172 = smul.addr %s171, 8
      %s173 = scalar_lea.vmem %s0, %s172
      %p174 = pneg %p52
      %p175 = pneg %p49
      %s176 = sadd.s32 %s17, %s18
      %p177 = scmp.lt.s32.totalorder %s176, 0
      %s178 = scalar_select %p177, %s176, 0
      %s179 = smul.u32 2, %s178
      %p180 = scmp.lt.s32.totalorder %s179, 1
      %s181 = scalar_select %p180, %s179, 1
      %s182 = smul.addr %s181, 8
      %s183 = scalar_lea.vmem %s1, %s182
      %p184 = pneg %p84
      %p185 = pneg %p81
      %p186 = pneg %p110
      %p187 = pneg %p107
      %p188 = scmp.lt.s32.totalorder %s17, 1
      %s189 = scalar_select %p188, %s17, 1
      %s190 = smul.addr %s189, 8
      %s191 = scalar_lea.vmem %s2, %s190
      %s192 = sadd.s32 %s17, %s18
      %p193 = scmp.lt.s32.totalorder %s192, 0
      %s194 = scalar_select %p193, %s192, 0
      %s195 = smul.u32 2, %s194
      %p196 = scmp.lt.s32.totalorder %s195, 1
      %s197 = scalar_select %p196, %s195, 1
      %s198 = smul.addr %s197, 8
      %s199 = scalar_lea.vmem %s0, %s198
      %s200 = sadd.s32 %s17, %s18
      %p201 = scmp.lt.s32.totalorder %s200, 0
      %s202 = scalar_select %p201, %s200, 0
      %s203 = smul.u32 2, %s202
      %s204 = sadd.s32 %s17, %s18
      %p205 = scmp.lt.s32.totalorder %s204, 0
      %s206 = scalar_select %p205, %s204, 0
      %s207 = smul.u32 2, %s206
      %p208 = scmp.lt.s32.totalorder %s207, 1
      %s209 = scalar_select %p208, %s207, 1
      %s210 = smul.addr %s209, 8
      %s211 = scalar_lea.vmem %s1, %s210
      %s212 = sadd.s32 %s17, %s18
      %p213 = scmp.lt.s32.totalorder %s212, 0
      %s214 = scalar_select %p213, %s212, 0
      %s215 = smul.u32 2, %s214
      %p216 = scmp.lt.s32.totalorder %s17, 1
      %s217 = scalar_select %p216, %s17, 1
      %s218 = smul.addr %s217, 8
      %s219 = scalar_lea.vmem %s2, %s218
      %s220 = sadd.s32 %s17, %s18
      %p221 = scmp.eq.s32.totalorder %s18, 0
      // Predicated region
      $region29: #{quantile_regression_loss.1} parent=27 // pred_check
        %p222 = pneg %p221
      $region30: #{quantile_regression_loss.1} parent=27 // pred_check_branch
        %224 = sbr.rel (%p222) target = $region32
      $region31: #{quantile_regression_loss.1} parent=27 // pred_region
        %225 = vst [vmem:[%s219] sm:$0xff] 0.0
      $region32: #{quantile_regression_loss.1} parent=27 // pred_fallthru
        _
      %v226 = vld [vmem:[%s211] sm:$0xff]
      %v227 = vld [vmem:[%s211 + $0x8] sm:$0xff]
      %v228 = vld [vmem:[%s199] sm:$0xff]
      %v229 = vld [vmem:[%s199 + $0x8] sm:$0xff]
      %v230 = vsub.f32 %v226, %v228
      %v231 = vsub.f32 %v227, %v229
      %v232 = vmul.f32 %v230, 0.7
      %v233 = vmul.f32 %v231, 0.7
      %v234 = vmin.f32 %v230, 0.0
      %v235 = vmin.f32 %v231, 0.0
      %v236 = vsub.f32 %v232, %v234
      %v237 = vsub.f32 %v233, %v235
      %p238 = scmp.ge.s32.totalorder %s220, 1
      // Predicated region
      $region33: #{quantile_regression_loss.1} parent=27 // pred_check
        %p239 = pneg %p238
      $region34: #{quantile_regression_loss.1} parent=27 // pred_check_branch
        %241 = sbr.rel (%p239) target = $region36
      $region35: #{quantile_regression_loss.1} parent=27 // pred_region
        %s242 = smul.u32 %s220, 16
        %v243 = vlaneseq
        %v244 = vshrl.u32 %v243, 7
        %v245 = vadd.s32 %v244, 8
        %v246 = vstv %s242
        %v247 = vadd.s32 %v246, %v244
        %v248 = vadd.s32 %v246, %v245
        %vm249 = vcmp.lt.s32.totalorder %v247, 16
        %vm250 = vcmp.lt.s32.totalorder %v248, 16
        %v251 = vsel %vm249, %v236, 0.0
        %v252 = vsel %vm250, %v237, 0.0
        %v253 = vld [vmem:[%s219] sm:$0xff]
        %v254 = vadd.f32 %v251, %v252
        %v255 = vadd.f32 %v253, %v254
        %256 = vst [vmem:[%s219] sm:$0xff] %v255
      $region36: #{quantile_regression_loss.1} parent=27 // pred_fallthru
        _
      %p257 = scmp.lt.s32.totalorder %s220, 1
      // Predicated region
      $region37: #{quantile_regression_loss.1} parent=27 // pred_check
        %p258 = pneg %p257
      $region38: #{quantile_regression_loss.1} parent=27 // pred_check_branch
        %260 = sbr.rel (%p258) target = $region40
      $region39: #{quantile_regression_loss.1} parent=27 // pred_region
        %v261 = vld [vmem:[%s219] sm:$0xff]
        %v262 = vadd.f32 %v236, %v237
        %v263 = vadd.f32 %v261, %v262
        %264 = vst [vmem:[%s219] sm:$0xff] %v263
      $region40: #{quantile_regression_loss.1} parent=27 // pred_fallthru
        _
      %p265 = scmp.lt.s32.totalorder %s17, 1
      %s266 = scalar_select %p265, %s17, 1
      %s267 = smul.addr %s266, 8
      %s268 = scalar_lea.vmem %s2, %s267
      // Predicated region
      $region41: #{quantile_regression_loss.1} parent=27 // pred_check
        %p269 = pneg %p107
      $region42: #{quantile_regression_loss.1} parent=27 // pred_check_branch
        %271 = sbr.rel (%p269) target = $region44
      $region43: #{quantile_regression_loss.1} parent=27 // pred_region
        _
      $region44: #{quantile_regression_loss.1} parent=27 // pred_fallthru
        _
    $region28: #{quantile_regression_loss.1} parent=5 // pred_fallthru
      _
    %p272 = scmp.le.s32.totalorder 2, %s8
    // Predicated region
    $region45: #{quantile_regression_loss.1} parent=5 // pred_check
      %p273 = pneg %p272
    $region46: #{quantile_regression_loss.1} parent=5 // pred_check_branch
      %275 = sbr.rel (%p273) target = $region48
    $region47: #{quantile_regression_loss.1} parent=5 // pred_region
      %s276 = ssub.s32 %s8, 2
      // Predicated region
      $region49: #{quantile_regression_loss.1} parent=47 // pred_check
        %p277 = pneg %p113
      $region50: #{quantile_regression_loss.1} parent=47 // pred_check_branch
        %279 = sbr.rel (%p277) target = $region52
      $region51: #{quantile_regression_loss.1} parent=47 // pred_region
        %p280 = scmp.lt.s32.totalorder %s19, 1
        %s281 = scalar_select %p280, %s19, 1
        %s282 = smul.addr %s281, 8
        %s283 = scalar_lea.vmem %s2, %s282
      $region52: #{quantile_regression_loss.1} parent=47 // pred_fallthru
        _
    $region48: #{quantile_regression_loss.1} parent=5 // pred_fallthru
      _
  $region6: #{quantile_regression_loss.1} parent=0 // loop_footer
    %s12 = sadd.s32 1, %s8
  $region7: #{quantile_regression_loss.1} parent=0 // loop_footer_branch
    %7 = sbr.rel target = $region3
  $region8: #{quantile_regression_loss.1} parent=0 // loop_exit
    _

</llo_original>
